<compile_context>
chip_gen: v7x
topology: tpu7x:2x2x1
jax: 0.10.0
libtpu: 0.0.40
codegen_flags: <defaults>
</compile_context>

<pallas_src>
import functools

import jax
import jax.numpy as jnp
from jax import lax
from jax.experimental import pallas as pl
from jax.experimental.pallas import tpu as pltpu


def _round_up(x, m):
    return ((x + m - 1) // m) * m


def _compiler_params(**kw):
    cp = getattr(pltpu, "CompilerParams", None) or getattr(pltpu, "TPUCompilerParams")
    return cp(**kw)


# ---------------------------------------------------------------------------
# Kernel 1: batched input projection (no sequential dependency -> hoisted).
# One MXU matmul per time chunk over all inputs sources; emits per-direction
# gate buffers gf/gb (bf16) with column layout [i f g o], each gate Hp wide.
# ---------------------------------------------------------------------------
def _make_proj_kernel(n_in, Hp):
    def kernel(*refs):
        x_refs = refs[:n_in]
        w_refs = refs[n_in:2 * n_in]
        b_ref = refs[2 * n_in]
        gf_ref = refs[2 * n_in + 1]
        gb_ref = refs[2 * n_in + 2]
        tc, bp, _ = x_refs[0].shape
        acc = None
        for x_ref, w_ref in zip(x_refs, w_refs):
            x2d = x_ref[...].reshape(tc * bp, x_ref.shape[2])
            part = jnp.dot(x2d, w_ref[...], preferred_element_type=jnp.float32)
            acc = part if acc is None else acc + part
        g = (acc + b_ref[...]).reshape(tc, bp, 8 * Hp)          # f32 accum + bias
        gf_ref[...] = g[..., :4 * Hp].astype(gf_ref.dtype)      # lane-dense 4*Hp-wide stores
        gb_ref[...] = g[..., 4 * Hp:].astype(gb_ref.dtype)
    return kernel


def _project(srcs, ws, bias, *, tc, Hp):
    """srcs: tuple of (T_pad, Bp, Din_i) bf16 inputs; ws: matching (Din_i, 8*Hp) bf16 weights."""
    T_pad, Bp = srcs[0].shape[0], srcs[0].shape[1]
    n_chunks = T_pad // tc
    in_specs = [pl.BlockSpec((tc, Bp, s.shape[2]), lambda p: (p, 0, 0)) for s in srcs]
    in_specs += [pl.BlockSpec(w.shape, lambda p: (0, 0)) for w in ws]
    in_specs += [pl.BlockSpec(bias.shape, lambda p: (0, 0))]
    out_specs = [pl.BlockSpec((tc, Bp, 4 * Hp), lambda p: (p, 0, 0)),
                 pl.BlockSpec((tc, Bp, 4 * Hp), lambda p: (p, 0, 0))]
    grid_spec = pltpu.PrefetchScalarGridSpec(
        num_scalar_prefetch=0, grid=(n_chunks,),
        in_specs=in_specs, out_specs=out_specs)
    return pl.pallas_call(
        _make_proj_kernel(len(srcs), Hp),
        grid_spec=grid_spec,
        out_shape=(jax.ShapeDtypeStruct((T_pad, Bp, 4 * Hp), jnp.bfloat16),
                   jax.ShapeDtypeStruct((T_pad, Bp, 4 * Hp), jnp.bfloat16)),
        compiler_params=_compiler_params(dimension_semantics=("parallel",)),
    )(*srcs, *ws, bias)


# ---------------------------------------------------------------------------
# Kernel 2: fused bidirectional LSTM recurrence, time-chunked with VMEM carry.
# State is lane-stacked (Bp, 2*Hp) = [h_fwd | h_bwd]; recurrent weight is
# block-diagonal (2*Hp, 8*Hp) with gate-major columns, so each step is one
# small MXU matmul + one set of sigmoid/tanh on 128-lane-aligned gate blocks.
# ---------------------------------------------------------------------------
def _bilstm_kernel(lens_ref, gf_ref, gb_ref, whh_ref, of_ref, ob_ref, h_ref, c_ref,
                   *, TC, Hp, T_pad):
    c_idx = pl.program_id(0)

    @pl.when(c_idx == 0)
    def _():
        h_ref[...] = jnp.zeros_like(h_ref)
        c_ref[...] = jnp.zeros_like(c_ref)

    Bp = lens_ref.shape[0]
    GH = 2 * Hp
    # Hoisted per-chunk constants (amortized over TC steps).
    lens = lens_ref[...]                                         # (Bp, 2Hp) int32
    is_fwd = lax.broadcasted_iota(jnp.int32, (Bp, GH), 1) < Hp   # fwd lanes mask
    whh = whh_ref[...]                                           # resident bf16 weights
    t0 = c_idx * TC

    def step(s, carry):
        h, c = carry
        gf = gf_ref[s].astype(jnp.float32)                       # fwd gates @ time t0+s
        gb = gb_ref[TC - 1 - s].astype(jnp.float32)              # bwd gates @ time T_pad-1-(t0+s)
        # Interleave per-gate to gate-major layout [i_f i_b | f_f f_b | g_f g_b | o_f o_b];
        # pure lane work on the otherwise-idle XLU slot, keeps all gate slices 128-aligned.
        parts = []
        for k in range(4):
            parts.append(gf[:, k * Hp:(k + 1) * Hp])
            parts.append(gb[:, k * Hp:(k + 1) * Hp])
        gx = jnp.concatenate(parts, axis=-1)                     # (Bp, 8Hp) f32

        gates = gx + jnp.dot(h.astype(whh.dtype), whh,
                             preferred_element_type=jnp.float32)
        i_g = jax.nn.sigmoid(gates[:, 0 * GH:1 * GH])
        f_g = jax.nn.sigmoid(gates[:, 1 * GH:2 * GH])
        g_g = jnp.tanh(gates[:, 2 * GH:3 * GH])
        o_g = jax.nn.sigmoid(gates[:, 3 * GH:4 * GH])
        c_new = f_g * c + i_g * g_g
        h_new = o_g * jnp.tanh(c_new)

        # Packed-sequence mask: fwd lanes use time t0+s, bwd lanes use T_pad-1-(t0+s).
        g_glob = t0 + s
        t_act = jnp.where(is_fwd, g_glob, T_pad - 1 - g_glob)
        valid = t_act < lens
        h = jnp.where(valid, h_new, h)
        c = jnp.where(valid, c_new, c)
        out = jnp.where(valid, h_new, 0.0)                       # exact zeros in padding

        of_ref[s] = out[:, :Hp].astype(of_ref.dtype)
        ob_ref[TC - 1 - s] = out[:, Hp:].astype(ob_ref.dtype)    # block index nc-1-c -> natural time
        return h, c

    h_fin, c_fin = lax.fori_loop(0, TC, step, (h_ref[...], c_ref[...]),
                                 unroll=min(4, TC))
    h_ref[...] = h_fin
    c_ref[...] = c_fin


def _recurrence(lens_lane, gf, gb, whh, *, TC, Hp, T_pad):
    Bp = lens_lane.shape[0]
    nc = T_pad // TC
    grid_spec = pltpu.PrefetchScalarGridSpec(
        num_scalar_prefetch=0,
        grid=(nc,),
        in_specs=[
            pl.BlockSpec((Bp, 2 * Hp), lambda c: (0, 0)),                 # lengths (resident)
            pl.BlockSpec((TC, Bp, 4 * Hp), lambda c: (c, 0, 0)),          # fwd gates, natural order
            pl.BlockSpec((TC, Bp, 4 * Hp), lambda c: (nc - 1 - c, 0, 0)), # bwd gates, reversed chunks
            pl.BlockSpec((2 * Hp, 8 * Hp), lambda c: (0, 0)),             # recurrent weights
        ],
        out_specs=[
            pl.BlockSpec((TC, Bp, Hp), lambda c: (c, 0, 0)),              # fwd outputs
            pl.BlockSpec((TC, Bp, Hp), lambda c: (nc - 1 - c, 0, 0)),     # bwd outputs (natural time)
        ],
        scratch_shapes=[pltpu.VMEM((Bp, 2 * Hp), jnp.float32),            # h carry
                        pltpu.VMEM((Bp, 2 * Hp), jnp.float32)],           # c carry
    )
    return pl.pallas_call(
        functools.partial(_bilstm_kernel, TC=TC, Hp=Hp, T_pad=T_pad),
        grid_spec=grid_spec,
        out_shape=(jax.ShapeDtypeStruct((T_pad, Bp, Hp), jnp.bfloat16),
                   jax.ShapeDtypeStruct((T_pad, Bp, Hp), jnp.bfloat16)),
        compiler_params=_compiler_params(dimension_semantics=("arbitrary",)),
    )(lens_lane, gf, gb, whh)


# ---------------------------------------------------------------------------
# Parameter preparation (done once): pad to (8,128)-friendly sizes and
# pre-permute the weight columns into the kernels' layouts.
# ---------------------------------------------------------------------------
def _place_gates(dst, src, row0, col_starts, H):
    r = src.shape[0]
    for k, c0 in enumerate(col_starts):
        dst = dst.at[row0:row0 + r, c0:c0 + H].set(src[:, k * H:(k + 1) * H])
    return dst


def init_birnn_params(key, input_dim, hidden_size, num_layers):
    """Raw params matching nn.LSTM(bidirectional=True) shapes (pre-transposed);
    gate column order is PyTorch's [i, f, g, o]; b = b_ih + b_hh."""
    params = []
    bound = 1.0 / jnp.sqrt(hidden_size)
    for layer in range(num_layers):
        in_dim = input_dim if layer == 0 else 2 * hidden_size
        dirs = []
        for _ in range(2):  # forward, backward
            key, k1, k2, k3, k4 = jax.random.split(key, 5)
            w_ih = jax.random.uniform(k1, (in_dim, 4 * hidden_size), jnp.float32, -bound, bound)
            w_hh = jax.random.uniform(k2, (hidden_size, 4 * hidden_size), jnp.float32, -bound, bound)
            b_ih = jax.random.uniform(k3, (4 * hidden_size,), jnp.float32, -bound, bound)
            b_hh = jax.random.uniform(k4, (4 * hidden_size,), jnp.float32, -bound, bound)
            dirs.append((w_ih, w_hh, (b_ih + b_hh).reshape(1, 4 * hidden_size)))
        params.append(tuple(dirs))
    return params


def prepare_params(raw_params, input_dim, hidden_size):
    H = hidden_size
    Hp = _round_up(H, 64)                     # gate block per direction; 2*Hp multiple of 128 lanes
    fwd_cols = [k * Hp for k in range(4)]
    bwd_cols = [4 * Hp + k * Hp for k in range(4)]
    rf_cols = [k * 2 * Hp for k in range(4)]
    rb_cols = [k * 2 * Hp + Hp for k in range(4)]
    layers = []
    for li, ((wih_f, whh_f, b_f), (wih_b, whh_b, b_b)) in enumerate(raw_params):
        if li == 0:
            w = jnp.zeros((input_dim, 8 * Hp), jnp.float32)
            w = _place_gates(w, wih_f, 0, fwd_cols, H)
            w = _place_gates(w, wih_b, 0, bwd_cols, H)
            proj_ws = (w.astype(jnp.bfloat16),)
        else:
            # split W_ih rows: [0:H] multiply prev fwd output, [H:2H] multiply prev bwd output
            wa = jnp.zeros((Hp, 8 * Hp), jnp.float32)
            wb = jnp.zeros((Hp, 8 * Hp), jnp.float32)
            wa = _place_gates(wa, wih_f[:H], 0, fwd_cols, H)
            wa = _place_gates(wa, wih_b[:H], 0, bwd_cols, H)
            wb = _place_gates(wb, wih_f[H:], 0, fwd_cols, H)
            wb = _place_gates(wb, wih_b[H:], 0, bwd_cols, H)
            proj_ws = (wa.astype(jnp.bfloat16), wb.astype(jnp.bfloat16))
        bias = jnp.zeros((1, 8 * Hp), jnp.float32)
        bias = _place_gates(bias, b_f, 0, fwd_cols, H)
        bias = _place_gates(bias, b_b, 0, bwd_cols, H)
        # block-diagonal recurrent weight, gate-major columns, rows = [h_f(Hp) ; h_b(Hp)]
        whh = jnp.zeros((2 * Hp, 8 * Hp), jnp.float32)
        whh = _place_gates(whh, whh_f, 0, rf_cols, H)
        whh = _place_gates(whh, whh_b, Hp, rb_cols, H)
        layers.append(dict(proj_ws=proj_ws, bias=bias, whh=whh.astype(jnp.bfloat16)))
    return layers


# ---------------------------------------------------------------------------
# Forward pass (the torch sort/index_select/unsort is a mathematical no-op for
# the LSTM result; packed-sequence semantics are realized via length masking).
# ---------------------------------------------------------------------------
def birnn_forward(feats, feat_lengths, prepared_params, hidden_size):
    B, T, D0 = feats.shape
    H = hidden_size
    Hp = _round_up(H, 64)
    Bp = _round_up(max(B, 1), 8)
    T8 = _round_up(T, 8)
    TC = min(32, T8)                         # time chunk: ~256 rows per projection block at Bp=8
    T_pad = _round_up(T8, TC)

    x0 = jnp.zeros((T_pad, Bp, D0), jnp.bfloat16)
    x0 = x0.at[:T, :B].set(jnp.transpose(feats.astype(jnp.float32), (1, 0, 2)).astype(jnp.bfloat16))
    lens_lane = jnp.zeros((Bp, 2 * Hp), jnp.int32)
    lens_lane = lens_lane.at[:B].set(feat_lengths.astype(jnp.int32)[:, None])

    srcs = (x0,)
    for lp in prepared_params:
        gf, gb = _project(srcs, lp["proj_ws"], lp["bias"], tc=TC, Hp=Hp)
        out_f, out_b = _recurrence(lens_lane, gf, gb, lp["whh"], TC=TC, Hp=Hp, T_pad=T_pad)
        srcs = (out_f, out_b)                # next layer consumes both halves directly (no concat)

    out = jnp.concatenate([srcs[0][:T, :B, :H], srcs[1][:T, :B, :H]], axis=-1)   # (T, B, 2H)
    output = jnp.transpose(out, (1, 0, 2)).astype(jnp.float32)                   # (B, T, 2H)
    return output, feat_lengths


# ---------------------------------------------------------------------------
# Pure-JAX f32 reference (for parity checking in __main__).
# ---------------------------------------------------------------------------
def _birnn_reference(feats, lens, raw_params, H):
    B, T, _ = feats.shape
    xs = jnp.transpose(feats.astype(jnp.float32), (1, 0, 2))
    lens = lens.astype(jnp.int32)

    def run_dir(x_tbd, w_ih, w_hh, b, reverse):
        def step(carry, t):
            h, c = carry
            tt = (T - 1 - t) if reverse else t
            g = x_tbd[tt] @ w_ih + h @ w_hh + b
            i = jax.nn.sigmoid(g[:, 0 * H:1 * H])
            f = jax.nn.sigmoid(g[:, 1 * H:2 * H])
            gg = jnp.tanh(g[:, 2 * H:3 * H])
            o = jax.nn.sigmoid(g[:, 3 * H:4 * H])
            c_new = f * c + i * gg
            h_new = o * jnp.tanh(c_new)
            valid = (tt < lens)[:, None]
            h = jnp.where(valid, h_new, h)
            c = jnp.where(valid, c_new, c)
            return (h, c), jnp.where(valid, h_new, 0.0)
        init = (jnp.zeros((B, H), jnp.float32), jnp.zeros((B, H), jnp.float32))
        _, outs = lax.scan(step, init, jnp.arange(T))
        return outs[::-1] if reverse else outs

    for (pf, pb) in raw_params:
        of = run_dir(xs, pf[0], pf[1], pf[2], False)
        ob = run_dir(xs, pb[0], pb[1], pb[2], True)
        xs = jnp.concatenate([of, ob], axis=-1)
    return jnp.transpose(xs, (1, 0, 2))


if __name__ == "__main__":
    config = {"input_dim": 16, "hidden_size": 32, "num_layers": 2}
    B, T = 2, 8

    key = jax.random.PRNGKey(0)
    key, k_feats = jax.random.split(key)
    feats = jax.random.normal(k_feats, (B, T, config["input_dim"]), jnp.float32)
    feat_lengths = jnp.array([8, 5], dtype=jnp.int32)

    raw_params = init_birnn_params(key, config["input_dim"],
                                   config["hidden_size"], config["num_layers"])
    prepared = prepare_params(raw_params, config["input_dim"], config["hidden_size"])

    output, output_lengths = birnn_forward(feats, feat_lengths, prepared, config["hidden_size"])
    # pad_packed_sequence pads only to max(lengths)
    t_max = int(jax.device_get(jnp.max(feat_lengths)))
    output = output[:, :t_max, :]

    output = jax.block_until_ready(output)
    output_lengths = jax.block_until_ready(output_lengths)

    assert output.shape == (B, t_max, 2 * config["hidden_size"])
    assert output_lengths.shape == (B,)
    # padded region of the shorter sequence must be exactly zero (packed-sequence semantics)
    assert float(jnp.max(jnp.abs(output[1, int(feat_lengths[1]):, :]))) == 0.0
    assert bool(jnp.all(jnp.isfinite(output)))

    # numerical parity against a pure-JAX f32 reference (bf16 projection/activation tolerance)
    ref = _birnn_reference(feats, feat_lengths, raw_params, config["hidden_size"])[:, :t_max, :]
    max_err = float(jnp.max(jnp.abs(output - ref)))
    assert max_err < 0.08, f"mismatch vs reference: {max_err}"

    print("KERNEL_OK")
</pallas_src>

<mosaic_0001>
module attributes {stable_mosaic.version = 11 : i64} {
  func.func @kernel(%arg0: i32, %arg1: memref<8x8x16xbf16, #tpu.memory_space<vmem>>, %arg2: memref<16x512xbf16, #tpu.memory_space<vmem>>, %arg3: memref<1x512xf32, #tpu.memory_space<vmem>>, %arg4: memref<8x8x256xbf16, #tpu.memory_space<vmem>>, %arg5: memref<8x8x256xbf16, #tpu.memory_space<vmem>>) attributes {dimension_semantics = [#tpu.dimension_semantics<parallel>], iteration_bounds = array<i64: 1>, scalar_prefetch = 0 : i64, scratch_operands = 0 : i64, tpu.core_type = #tpu.core_type<tc>, window_params = [{transform_indices = @transform_0, window_bounds = array<i64: 8, 8, 16>}, {pipeline_mode = #tpu.pipeline_mode<synchronous>, transform_indices = @transform_1, window_bounds = array<i64: 16, 512>}, {pipeline_mode = #tpu.pipeline_mode<synchronous>, transform_indices = @transform_2, window_bounds = array<i64: 1, 512>}, {transform_indices = @transform_3, window_bounds = array<i64: 8, 8, 256>}, {transform_indices = @transform_4, window_bounds = array<i64: 8, 8, 256>}]} {
    %c0 = arith.constant 0 : index
    %c0_0 = arith.constant 0 : index
    %c0_1 = arith.constant 0 : index
    %0 = vector.load %arg1[%c0, %c0_0, %c0_1] : memref<8x8x16xbf16, #tpu.memory_space<vmem>>, vector<8x8x16xbf16>
    %1 = vector.shape_cast %0 : vector<8x8x16xbf16> to vector<64x16xbf16>
    %c0_2 = arith.constant 0 : index
    %c0_3 = arith.constant 0 : index
    %2 = vector.load %arg2[%c0_2, %c0_3] : memref<16x512xbf16, #tpu.memory_space<vmem>>, vector<16x512xbf16>
    %cst = arith.constant dense<0.000000e+00> : vector<64x512xf32>
    %3 = tpu.matmul %1, %2, %cst {dimension_numbers = #tpu.dot_dimension_numbers<[1], [0], [0], [1], [0, 0, 1, 1], [], []>} : vector<64x16xbf16>, vector<16x512xbf16>, vector<64x512xf32> -> vector<64x512xf32>
    %c0_4 = arith.constant 0 : index
    %c0_5 = arith.constant 0 : index
    %4 = vector.load %arg3[%c0_4, %c0_5] : memref<1x512xf32, #tpu.memory_space<vmem>>, vector<1x512xf32>
    %5 = vector.broadcast %4 : vector<1x512xf32> to vector<64x512xf32>
    %6 = arith.addf %3, %5 : vector<64x512xf32>
    %7 = vector.shape_cast %6 : vector<64x512xf32> to vector<8x8x512xf32>
    %8 = vector.extract_strided_slice %7 {offsets = [0, 0, 0], sizes = [8, 8, 256], strides = [1, 1, 1]} : vector<8x8x512xf32> to vector<8x8x256xf32>
    %9 = arith.truncf %8 : vector<8x8x256xf32> to vector<8x8x256xbf16>
    %c0_6 = arith.constant 0 : index
    %c0_7 = arith.constant 0 : index
    %c0_8 = arith.constant 0 : index
    %10 = vector.load %arg4[%c0_6, %c0_7, %c0_8] : memref<8x8x256xbf16, #tpu.memory_space<vmem>>, vector<8x8x256xbf16>
    tpu.vector_store %arg4[%c0_6, %c0_7, %c0_8], %9 {strides = array<i32>} : memref<8x8x256xbf16, #tpu.memory_space<vmem>>, vector<8x8x256xbf16>,
    %11 = vector.extract_strided_slice %7 {offsets = [0, 0, 256], sizes = [8, 8, 256], strides = [1, 1, 1]} : vector<8x8x512xf32> to vector<8x8x256xf32>
    %12 = arith.truncf %11 : vector<8x8x256xf32> to vector<8x8x256xbf16>
    %c0_9 = arith.constant 0 : index
    %c0_10 = arith.constant 0 : index
    %c0_11 = arith.constant 0 : index
    %13 = vector.load %arg5[%c0_9, %c0_10, %c0_11] : memref<8x8x256xbf16, #tpu.memory_space<vmem>>, vector<8x8x256xbf16>
    tpu.vector_store %arg5[%c0_9, %c0_10, %c0_11], %12 {strides = array<i32>} : memref<8x8x256xbf16, #tpu.memory_space<vmem>>, vector<8x8x256xbf16>,
    return
  }
  func.func @transform_0(%arg0: i32) -> (i32, i32, i32) {
    %c0_i32 = arith.constant 0 : i32
    %c0_i32_0 = arith.constant 0 : i32
    %c0_i32_1 = arith.constant 0 : i32
    return %arg0, %c0_i32, %c0_i32_0 : i32, i32, i32
  }
  func.func @transform_1(%arg0: i32) -> (i32, i32) {
    %c0_i32 = arith.constant 0 : i32
    %c0_i32_0 = arith.constant 0 : i32
    %c0_i32_1 = arith.constant 0 : i32
    return %c0_i32, %c0_i32_0 : i32, i32
  }
  func.func @transform_2(%arg0: i32) -> (i32, i32) {
    %c0_i32 = arith.constant 0 : i32
    %c0_i32_0 = arith.constant 0 : i32
    %c0_i32_1 = arith.constant 0 : i32
    return %c0_i32, %c0_i32_0 : i32, i32
  }
  func.func @transform_3(%arg0: i32) -> (i32, i32, i32) {
    %c0_i32 = arith.constant 0 : i32
    %c0_i32_0 = arith.constant 0 : i32
    %c0_i32_1 = arith.constant 0 : i32
    return %arg0, %c0_i32, %c0_i32_0 : i32, i32, i32
  }
  func.func @transform_4(%arg0: i32) -> (i32, i32, i32) {
    %c0_i32 = arith.constant 0 : i32
    %c0_i32_0 = arith.constant 0 : i32
    %c0_i32_1 = arith.constant 0 : i32
    return %arg0, %c0_i32, %c0_i32_0 : i32, i32, i32
  }
}

</mosaic_0001>

<llo_original>
// kernel: tpu_custom_call.1
$region0: #{tpu_custom_call.1}
  #allocation0 [shape = 'u32[]', space=smem, size = 0x4, offset = 0x4, fixed_abs, tag = 'smem constant byte address 0x4 - core index']
  #allocation1 [shape = 'u32[144,128]{1,0:T(1,128)}', space=vmem, size = 0x12000, scoped, tag = 'internal scratch']
  %s0 = inlined_call_operand.hbm [shape: bf16[8,8,16], index: 0, kind: input, shape index: {}]
  %s1 = inlined_call_operand.hbm [shape: bf16[16,512], index: 1, kind: input, shape index: {}]
  %s2 = inlined_call_operand.vmem [shape: f32[1,512], index: 2, kind: input, shape index: {}]
  %s3 = inlined_call_operand.hbm [shape: bf16[8,8,256], index: 3, kind: output, shape index: {0}]
  %s4 = inlined_call_operand.hbm [shape: bf16[8,8,256], index: 4, kind: output, shape index: {1}]
  %5 = xla_tuple %s3, %s4
  %s6 = sld [smem:[#allocation0]]
  $region38: #{tpu_custom_call.1} parent=0
    _
  %s8 = ssub.s32 1, %s6
  %s9 = scalar_select 0, %s8, %s6
  $region1: #{tpu_custom_call.1} parent=0
    #allocation2 [shape = 'u8[16384]{0}', space=vmem, size = 0x4000, scoped, tag = 'input window, operand 0, single buffered']
    #allocation3 [shape = 's32[1]{0}', space=sflag, size = 0x4, scoped, tag = 'scoped memory for tpu_custom_call.1']
    #allocation4 [shape = 's32[1]{0}', space=sflag, size = 0x4, scoped, tag = 'scoped memory for tpu_custom_call.1']
    #allocation5 [shape = 'u8[16384]{0}', space=vmem, size = 0x4000, scoped, tag = 'input window, operand 1, single buffered']
    #allocation6 [shape = 's32[1]{0}', space=sflag, size = 0x4, scoped, tag = 'scoped memory for tpu_custom_call.1']
    #allocation7 [shape = 'u8[32768]{0}', space=vmem, size = 0x8000, scoped, tag = 'output window, operand 0, single buffered']
    #allocation8 [shape = 'u8[32768]{0}', space=vmem, size = 0x8000, scoped, tag = 'output window, operand 1, single buffered']
    #allocation9 [shape = 's32[1]{0}', space=sflag, size = 0x4, scoped, tag = 'scoped memory for tpu_custom_call.1']
    %10 = vsyncpa [#allocation3], 0
    %11 = vsyncpa [#allocation6], 0
    %12 = vsyncpa [#allocation4], 0
    %13 = vsyncpa [#allocation9], 0
    // Predicated region
    $region2: #{tpu_custom_call.1} parent=1 // pred_check
      _
    $region3: #{tpu_custom_call.1} parent=1 // pred_check_branch
      %15 = sbr.rel (0) target = $region5
    $region4: #{tpu_custom_call.1} parent=1 // pred_region
      %s17 = ssub.s32 512, 512
      %18 = vsyncadd [#allocation3], %s17
      %s19 = sshll.u32 [#allocation2], 4
      %s20 = int_to_ptr.vmem [resolvable:$true] %s19
      %25 = dma.hbm_to_vmem [thread:$0]  %s0, 512, %s20, [#allocation3], 64, 64, 4
    $region5: #{tpu_custom_call.1} parent=1 // pred_fallthru
      _
    // Predicated region
    $region6: #{tpu_custom_call.1} parent=1 // pred_check
      _
    $region7: #{tpu_custom_call.1} parent=1 // pred_check_branch
      %27 = sbr.rel (0) target = $region9
    $region8: #{tpu_custom_call.1} parent=1 // pred_region
      %s29 = ssub.s32 512, 512
      %30 = vsyncadd [#allocation6], %s29
      %s31 = sshll.u32 [#allocation5], 4
      %s32 = int_to_ptr.vmem [resolvable:$true] %s31
      %37 = dma.hbm_to_vmem [thread:$0]  %s1, 512, %s32, [#allocation6], 256, 256, 16
    $region9: #{tpu_custom_call.1} parent=1 // pred_fallthru
      _
    // Predicated region
    $region10: #{tpu_custom_call.1} parent=1 // pred_check
      _
    $region11: #{tpu_custom_call.1} parent=1 // pred_check_branch
      %39 = sbr.rel (0) target = $region13
    $region12: #{tpu_custom_call.1} parent=1 // pred_region
      _
    $region13: #{tpu_custom_call.1} parent=1 // pred_fallthru
      _
    // Predicated region
    $region14: #{tpu_custom_call.1} parent=1 // pred_check
      _
    $region15: #{tpu_custom_call.1} parent=1 // pred_check_branch
      %41 = sbr.rel (0) target = $region17
    $region16: #{tpu_custom_call.1} parent=1 // pred_region
      %42 = dma.done [#allocation3], 512
    $region17: #{tpu_custom_call.1} parent=1 // pred_fallthru
      _
    // Predicated region
    $region18: #{tpu_custom_call.1} parent=1 // pred_check
      _
    $region19: #{tpu_custom_call.1} parent=1 // pred_check_branch
      %44 = sbr.rel (0) target = $region21
    $region20: #{tpu_custom_call.1} parent=1 // pred_region
      %45 = dma.done [#allocation6], 512
    $region21: #{tpu_custom_call.1} parent=1 // pred_fallthru
      _
    %v47 = vld [vmem:[#allocation2] sm:$0xf]
    %v48 = vld [vmem:[#allocation2 + $0x4] sm:$0xf]
    %v49 = vld [vmem:[#allocation2 + $0x8] sm:$0xf]
    %v50 = vld [vmem:[#allocation2 + $0xc] sm:$0xf]
    %v51 = vld [vmem:[#allocation2 + $0x10] sm:$0xf]
    %v52 = vld [vmem:[#allocation2 + $0x14] sm:$0xf]
    %v53 = vld [vmem:[#allocation2 + $0x18] sm:$0xf]
    %v54 = vld [vmem:[#allocation2 + $0x1c] sm:$0xf]
    %v55 = vld [vmem:[#allocation5] sm:$0xff]
    %v56 = vld [vmem:[#allocation5 + $0x8] sm:$0xff]
    %v57 = vld [vmem:[#allocation5 + $0x10] sm:$0xff]
    %v58 = vld [vmem:[#allocation5 + $0x18] sm:$0xff]
    %v59 = vld [vmem:[%s2] sm:$0xf]
    %v61 = vlaneseq
    %v62 = vshrl.u32 %v61, 7
    %v63 = vsub.s32 0, %v62
    %v64 = vrot.slane %v59, %v63
    %v65 = vlaneseq
    %v66 = vshrl.u32 %v65, 7
    %v67 = vsub.s32 1, %v66
    %v68 = vrot.slane %v59, %v67
    %v69 = vlaneseq
    %v70 = vshrl.u32 %v69, 7
    %v71 = vsub.s32 2, %v70
    %v72 = vrot.slane %v59, %v71
    %v73 = vlaneseq
    %v74 = vshrl.u32 %v73, 7
    %v75 = vsub.s32 3, %v74
    %v76 = vrot.slane %v59, %v75
    %v89 = vunpack.c.l.b16 %v47
    %v90 = vunpack.c.l.b16 %v48
    %v91 = vunpack.c.l.b16 %v49
    %v92 = vunpack.c.l.b16 %v50
    %v93 = vunpack.c.l.b16 %v51
    %v94 = vunpack.c.l.b16 %v52
    %v95 = vunpack.c.l.b16 %v53
    %v96 = vunpack.c.l.b16 %v54
    %v97 = vpack.c.b16 %v90, %v89
    %v98 = vpack.c.b16 %v92, %v91
    %v99 = vpack.c.b16 %v94, %v93
    %v100 = vpack.c.b16 %v96, %v95
    %v105 = vunpack.c.l.b16 %v55
    %v106 = vunpack.c.h.b16 %v55
    %v107 = vunpack.c.l.b16 %v56
    %v108 = vunpack.c.h.b16 %v56
    %v109 = vunpack.c.l.b16 %v57
    %v110 = vunpack.c.h.b16 %v57
    %v111 = vunpack.c.l.b16 %v58
    %v112 = vunpack.c.h.b16 %v58
    %v113 = vpack.c.b16 %v109, %v105
    %v114 = vpack.c.b16 %v110, %v106
    %v115 = vpack.c.b16 %v111, %v107
    %v116 = vpack.c.b16 %v112, %v108
    %vm121 = vcmask 130048
    %v123 = vsel %vm121, %v97, 0
    %v126 = vsel %vm121, %v98, 0
    %v129 = vsel %vm121, %v99, 0
    %v132 = vsel %vm121, %v100, 0
    %134 = vmatprep.subr.bf16.mxu0 %v114
    %135 = vmatpush1.bf16.msra.mxu0 %v113
    %136 = vmatprep.subr.bf16.mxu0 0
    %137 = vmatpush1.bf16.msra.mxu0 0
    %138 = vmatprep.subr.bf16.mxu0 0
    %139 = vmatpush1.bf16.msra.mxu0 0
    %140 = vmatprep.subr.bf16.mxu0 0
    %141 = vmatpush1.bf16.msra.mxu0 0
    %142 = vmatprep.subr.bf16.mxu0 0
    %143 = vmatpush1.bf16.msra.mxu0 0
    %144 = vmatprep.subr.bf16.mxu0 0
    %145 = vmatpush1.bf16.msra.mxu0 0
    %146 = vmatprep.subr.bf16.mxu0 0
    %147 = vmatpush1.bf16.msra.mxu0 0
    %148 = vmatprep.subr.bf16.mxu0 0
    %149 = vmatpush1.bf16.msra.mxu0 0
    %150 = vmatprep.subr.bf16.mxu0 0
    %151 = vmatpush1.bf16.msra.mxu0 0
    %152 = vmatprep.subr.bf16.mxu0 0
    %153 = vmatpush1.bf16.msra.mxu0 0
    %154 = vmatprep.subr.bf16.mxu0 0
    %155 = vmatpush1.bf16.msra.mxu0 0
    %156 = vmatprep.subr.bf16.mxu0 0
    %157 = vmatpush1.bf16.msra.mxu0 0
    %158 = vmatprep.subr.bf16.mxu0 0
    %159 = vmatpush1.bf16.msra.mxu0 0
    %160 = vmatprep.subr.bf16.mxu0 0
    %161 = vmatpush1.bf16.msra.mxu0 0
    %162 = vmatprep.subr.bf16.mxu0 0
    %163 = vmatpush1.bf16.msra.mxu0 0
    %164 = vmatprep.subr.bf16.mxu0 0
    %165 = vmatpush1.bf16.msra.mxu0 0
    %166 = vmatprep.mubr.bf16.mxu0 0
    %167 = vmatmul.mubr.bf16.gmra.mrb[0].mxu0 %v123
    %v168 = vpop.f32.mrb[0].mxu0
    %v169 = vadd.f32 %v64, %v168
    %v170 = vpop.f32.mrb[0].mxu0
    %v171 = vadd.f32 %v68, %v170
    %v172 = vpop.f32.mrb[0].mxu0
    %v173 = vadd.f32 %v64, %v172
    %v174 = vpop.f32.mrb[0].mxu0
    %v175 = vadd.f32 %v68, %v174
    %176 = vmatprep.mubr.bf16.mxu0 0
    %177 = vmatmul.mubr.bf16.gmra.mrb[0].mxu0 %v126
    %v178 = vpop.f32.mrb[0].mxu0
    %v179 = vadd.f32 %v64, %v178
    %v180 = vpop.f32.mrb[0].mxu0
    %v181 = vadd.f32 %v68, %v180
    %v182 = vpop.f32.mrb[0].mxu0
    %v183 = vadd.f32 %v64, %v182
    %v184 = vpop.f32.mrb[0].mxu0
    %v185 = vadd.f32 %v68, %v184
    %186 = vmatprep.mubr.bf16.mxu0 0
    %187 = vmatmul.mubr.bf16.gmra.mrb[0].mxu0 %v129
    %v188 = vpop.f32.mrb[0].mxu0
    %v189 = vadd.f32 %v64, %v188
    %v190 = vpop.f32.mrb[0].mxu0
    %v191 = vadd.f32 %v68, %v190
    %v192 = vpop.f32.mrb[0].mxu0
    %v193 = vadd.f32 %v64, %v192
    %v194 = vpop.f32.mrb[0].mxu0
    %v195 = vadd.f32 %v68, %v194
    %196 = vmatprep.mubr.bf16.mxu0 0
    %197 = vmatmul.mubr.bf16.gmra.mrb[0].mxu0 %v132
    %v198 = vpop.f32.mrb[0].mxu0
    %v199 = vadd.f32 %v64, %v198
    %v200 = vpop.f32.mrb[0].mxu0
    %v201 = vadd.f32 %v68, %v200
    %v202 = vpop.f32.mrb[0].mxu0
    %v203 = vadd.f32 %v64, %v202
    %v204 = vpop.f32.mrb[0].mxu0
    %v205 = vadd.f32 %v68, %v204
    %206 = vdwg.mxu0
    %207 = vmatprep.subr.bf16.mxu0 %v116
    %208 = vmatpush1.bf16.msra.mxu0 %v115
    %209 = vmatprep.subr.bf16.mxu0 0
    %210 = vmatpush1.bf16.msra.mxu0 0
    %211 = vmatprep.subr.bf16.mxu0 0
    %212 = vmatpush1.bf16.msra.mxu0 0
    %213 = vmatprep.subr.bf16.mxu0 0
    %214 = vmatpush1.bf16.msra.mxu0 0
    %215 = vmatprep.subr.bf16.mxu0 0
    %216 = vmatpush1.bf16.msra.mxu0 0
    %217 = vmatprep.subr.bf16.mxu0 0
    %218 = vmatpush1.bf16.msra.mxu0 0
    %219 = vmatprep.subr.bf16.mxu0 0
    %220 = vmatpush1.bf16.msra.mxu0 0
    %221 = vmatprep.subr.bf16.mxu0 0
    %222 = vmatpush1.bf16.msra.mxu0 0
    %223 = vmatprep.subr.bf16.mxu0 0
    %224 = vmatpush1.bf16.msra.mxu0 0
    %225 = vmatprep.subr.bf16.mxu0 0
    %226 = vmatpush1.bf16.msra.mxu0 0
    %227 = vmatprep.subr.bf16.mxu0 0
    %228 = vmatpush1.bf16.msra.mxu0 0
    %229 = vmatprep.subr.bf16.mxu0 0
    %230 = vmatpush1.bf16.msra.mxu0 0
    %231 = vmatprep.subr.bf16.mxu0 0
    %232 = vmatpush1.bf16.msra.mxu0 0
    %233 = vmatprep.subr.bf16.mxu0 0
    %234 = vmatpush1.bf16.msra.mxu0 0
    %235 = vmatprep.subr.bf16.mxu0 0
    %236 = vmatpush1.bf16.msra.mxu0 0
    %237 = vmatprep.subr.bf16.mxu0 0
    %238 = vmatpush1.bf16.msra.mxu0 0
    %239 = vmatprep.mubr.bf16.mxu0 0
    %240 = vmatmul.mubr.bf16.gmra.mrb[0].mxu0 %v123
    %v241 = vpop.f32.mrb[0].mxu0
    %v242 = vadd.f32 %v72, %v241
    %v243 = vpop.f32.mrb[0].mxu0
    %v244 = vadd.f32 %v76, %v243
    %v245 = vpop.f32.mrb[0].mxu0
    %v246 = vadd.f32 %v72, %v245
    %v247 = vpop.f32.mrb[0].mxu0
    %v248 = vadd.f32 %v76, %v247
    %249 = vmatprep.mubr.bf16.mxu0 0
    %250 = vmatmul.mubr.bf16.gmra.mrb[0].mxu0 %v126
    %v251 = vpop.f32.mrb[0].mxu0
    %v252 = vadd.f32 %v72, %v251
    %v253 = vpop.f32.mrb[0].mxu0
    %v254 = vadd.f32 %v76, %v253
    %v255 = vpop.f32.mrb[0].mxu0
    %v256 = vadd.f32 %v72, %v255
    %v257 = vpop.f32.mrb[0].mxu0
    %v258 = vadd.f32 %v76, %v257
    %259 = vmatprep.mubr.bf16.mxu0 0
    %260 = vmatmul.mubr.bf16.gmra.mrb[0].mxu0 %v129
    %v261 = vpop.f32.mrb[0].mxu0
    %v262 = vadd.f32 %v72, %v261
    %v263 = vpop.f32.mrb[0].mxu0
    %v264 = vadd.f32 %v76, %v263
    %v265 = vpop.f32.mrb[0].mxu0
    %v266 = vadd.f32 %v72, %v265
    %v267 = vpop.f32.mrb[0].mxu0
    %v268 = vadd.f32 %v76, %v267
    %269 = vmatprep.mubr.bf16.mxu0 0
    %270 = vmatmul.mubr.bf16.gmra.mrb[0].mxu0 %v132
    %v271 = vpop.f32.mrb[0].mxu0
    %v272 = vadd.f32 %v72, %v271
    %v273 = vpop.f32.mrb[0].mxu0
    %v274 = vadd.f32 %v76, %v273
    %v275 = vpop.f32.mrb[0].mxu0
    %v276 = vadd.f32 %v72, %v275
    %v277 = vpop.f32.mrb[0].mxu0
    %v278 = vadd.f32 %v76, %v277
    %279 = vdwg.mxu0
    %v280 = vpack.c.bf16 %v169, %v169
    %v281 = vpack.c.bf16 %v171, %v171
    %v282 = vpack.c.bf16 %v173, %v173
    %v283 = vpack.c.bf16 %v175, %v175
    %v284 = vpack.c.bf16 %v179, %v179
    %v285 = vpack.c.bf16 %v181, %v181
    %v286 = vpack.c.bf16 %v183, %v183
    %v287 = vpack.c.bf16 %v185, %v185
    %v288 = vpack.c.bf16 %v189, %v189
    %v289 = vpack.c.bf16 %v191, %v191
    %v290 = vpack.c.bf16 %v193, %v193
    %v291 = vpack.c.bf16 %v195, %v195
    %v292 = vpack.c.bf16 %v199, %v199
    %v293 = vpack.c.bf16 %v201, %v201
    %v294 = vpack.c.bf16 %v203, %v203
    %v295 = vpack.c.bf16 %v205, %v205
    %v312 = vunpack.c.l.b16 %v280
    %v313 = vunpack.c.l.b16 %v281
    %v314 = vunpack.c.l.b16 %v282
    %v315 = vunpack.c.l.b16 %v283
    %v316 = vunpack.c.l.b16 %v284
    %v317 = vunpack.c.l.b16 %v285
    %v318 = vunpack.c.l.b16 %v286
    %v319 = vunpack.c.l.b16 %v287
    %v320 = vunpack.c.l.b16 %v288
    %v321 = vunpack.c.l.b16 %v289
    %v322 = vunpack.c.l.b16 %v290
    %v323 = vunpack.c.l.b16 %v291
    %v324 = vunpack.c.l.b16 %v292
    %v325 = vunpack.c.l.b16 %v293
    %v326 = vunpack.c.l.b16 %v294
    %v327 = vunpack.c.l.b16 %v295
    %v328 = vpack.c.b16 %v313, %v312
    %v329 = vpack.c.b16 %v315, %v314
    %v330 = vpack.c.b16 %v317, %v316
    %v331 = vpack.c.b16 %v319, %v318
    %v332 = vpack.c.b16 %v321, %v320
    %v333 = vpack.c.b16 %v323, %v322
    %v334 = vpack.c.b16 %v325, %v324
    %v335 = vpack.c.b16 %v327, %v326
    %344 = vst [vmem:[#allocation7] sm:$0xff] %v328
    %345 = vst [vmem:[#allocation7 + $0x8] sm:$0xff] %v329
    %346 = vst [vmem:[#allocation7 + $0x10] sm:$0xff] %v330
    %347 = vst [vmem:[#allocation7 + $0x18] sm:$0xff] %v331
    %348 = vst [vmem:[#allocation7 + $0x20] sm:$0xff] %v332
    %349 = vst [vmem:[#allocation7 + $0x28] sm:$0xff] %v333
    %350 = vst [vmem:[#allocation7 + $0x30] sm:$0xff] %v334
    %351 = vst [vmem:[#allocation7 + $0x38] sm:$0xff] %v335
    %v352 = vpack.c.bf16 %v242, %v242
    %v353 = vpack.c.bf16 %v244, %v244
    %v354 = vpack.c.bf16 %v246, %v246
    %v355 = vpack.c.bf16 %v248, %v248
    %v356 = vpack.c.bf16 %v252, %v252
    %v357 = vpack.c.bf16 %v254, %v254
    %v358 = vpack.c.bf16 %v256, %v256
    %v359 = vpack.c.bf16 %v258, %v258
    %v360 = vpack.c.bf16 %v262, %v262
    %v361 = vpack.c.bf16 %v264, %v264
    %v362 = vpack.c.bf16 %v266, %v266
    %v363 = vpack.c.bf16 %v268, %v268
    %v364 = vpack.c.bf16 %v272, %v272
    %v365 = vpack.c.bf16 %v274, %v274
    %v366 = vpack.c.bf16 %v276, %v276
    %v367 = vpack.c.bf16 %v278, %v278
    %v384 = vunpack.c.l.b16 %v352
    %v385 = vunpack.c.l.b16 %v353
    %v386 = vunpack.c.l.b16 %v354
    %v387 = vunpack.c.l.b16 %v355
    %v388 = vunpack.c.l.b16 %v356
    %v389 = vunpack.c.l.b16 %v357
    %v390 = vunpack.c.l.b16 %v358
    %v391 = vunpack.c.l.b16 %v359
    %v392 = vunpack.c.l.b16 %v360
    %v393 = vunpack.c.l.b16 %v361
    %v394 = vunpack.c.l.b16 %v362
    %v395 = vunpack.c.l.b16 %v363
    %v396 = vunpack.c.l.b16 %v364
    %v397 = vunpack.c.l.b16 %v365
    %v398 = vunpack.c.l.b16 %v366
    %v399 = vunpack.c.l.b16 %v367
    %v400 = vpack.c.b16 %v385, %v384
    %v401 = vpack.c.b16 %v387, %v386
    %v402 = vpack.c.b16 %v389, %v388
    %v403 = vpack.c.b16 %v391, %v390
    %v404 = vpack.c.b16 %v393, %v392
    %v405 = vpack.c.b16 %v395, %v394
    %v406 = vpack.c.b16 %v397, %v396
    %v407 = vpack.c.b16 %v399, %v398
    %416 = vst [vmem:[#allocation8] sm:$0xff] %v400
    %417 = vst [vmem:[#allocation8 + $0x8] sm:$0xff] %v401
    %418 = vst [vmem:[#allocation8 + $0x10] sm:$0xff] %v402
    %419 = vst [vmem:[#allocation8 + $0x18] sm:$0xff] %v403
    %420 = vst [vmem:[#allocation8 + $0x20] sm:$0xff] %v404
    %421 = vst [vmem:[#allocation8 + $0x28] sm:$0xff] %v405
    %422 = vst [vmem:[#allocation8 + $0x30] sm:$0xff] %v406
    %423 = vst [vmem:[#allocation8 + $0x38] sm:$0xff] %v407
    // Predicated region
    $region22: #{tpu_custom_call.1} parent=1 // pred_check
      _
    $region23: #{tpu_custom_call.1} parent=1 // pred_check_branch
      %425 = sbr.rel (0) target = $region25
    $region24: #{tpu_custom_call.1} parent=1 // pred_region
      %s427 = ssub.s32 1024, 1024
      %428 = vsyncadd [#allocation4], %s427
      %s429 = sshll.u32 [#allocation7], 4
      %s430 = int_to_ptr.vmem [resolvable:$true] %s429
      %435 = dma.vmem_to_hbm [thread:$0]  %s430, 1024, %s3, [#allocation4], 128, 128, 8
    $region25: #{tpu_custom_call.1} parent=1 // pred_fallthru
      _
    // Predicated region
    $region26: #{tpu_custom_call.1} parent=1 // pred_check
      _
    $region27: #{tpu_custom_call.1} parent=1 // pred_check_branch
      %437 = sbr.rel (0) target = $region29
    $region28: #{tpu_custom_call.1} parent=1 // pred_region
      %s439 = ssub.s32 1024, 1024
      %440 = vsyncadd [#allocation9], %s439
      %s441 = sshll.u32 [#allocation8], 4
      %s442 = int_to_ptr.vmem [resolvable:$true] %s441
      %447 = dma.vmem_to_hbm [thread:$0]  %s442, 1024, %s4, [#allocation9], 128, 128, 8
    $region29: #{tpu_custom_call.1} parent=1 // pred_fallthru
      _
    // Predicated region
    $region30: #{tpu_custom_call.1} parent=1 // pred_check
      _
    $region31: #{tpu_custom_call.1} parent=1 // pred_check_branch
      %449 = sbr.rel (0) target = $region33
    $region32: #{tpu_custom_call.1} parent=1 // pred_region
      %450 = dma.done [#allocation4], 1024
    $region33: #{tpu_custom_call.1} parent=1 // pred_fallthru
      _
    // Predicated region
    $region34: #{tpu_custom_call.1} parent=1 // pred_check
      _
    $region35: #{tpu_custom_call.1} parent=1 // pred_check_branch
      %452 = sbr.rel (0) target = $region37
    $region36: #{tpu_custom_call.1} parent=1 // pred_region
      %453 = dma.done [#allocation9], 1024
    $region37: #{tpu_custom_call.1} parent=1 // pred_fallthru
      _
    %454 = vsyncpa [#allocation3], 1
    %455 = vsyncpa [#allocation6], 1
    %456 = vsyncpa [#allocation4], 1
    %457 = vsyncpa [#allocation9], 1

</llo_original>
